<compile_context>
chip_gen: v5e
topology: v5e:2x2
jax: 0.10.0
libtpu: 0.0.40
codegen_flags: <defaults>
</compile_context>

<pallas_src>
import math

import jax
import jax.numpy as jnp
from jax.experimental import pallas as pl
from jax.experimental.pallas import tpu as pltpu

IMG_DIM = 784
HIDDEN = 128


def _round_up(x, m):
    return ((x + m - 1) // m) * m


def disc_kernel(x_ref, w1_ref, b1_ref, w2_ref, b2_ref, o_ref):
    # Layer 1: (TILE_B, 784) @ (784, 128) on the MXU, f32 accumulation
    # regardless of x/w1 dtype (f32 or bf16).
    h = jnp.dot(x_ref[...], w1_ref[...], preferred_element_type=jnp.float32)
    h = h + b1_ref[...]                                   # (TILE_B,128)+(1,128)
    # LeakyReLU(0.1) on the VPU.
    h = jnp.where(h >= 0, h, 0.1 * h)
    # Layer 2 (out_features = 1): VPU multiply + XLU row reduction instead of
    # a (TILE_B,128)@(128,1) matmul that would waste nearly the whole MXU.
    z = jnp.sum(h * w2_ref[...], axis=-1, keepdims=True)  # (TILE_B, 1)
    z = z + b2_ref[0, 0]                                  # scalar bias (SMEM)
    # Exact sigmoid: exp lives on the otherwise-idle EUP slot; the kernel is
    # DMA-bound so the approximate reciprocal would buy zero wall-clock.
    o_ref[...] = jax.nn.sigmoid(z)


def discriminator_forward(x, w1, b1, w2, b2, *, tile_b=None):
    """x: (B, 784) f32 or bf16; w1: (784, 128); b1: (128,)/(1,128);
    w2: (128, 1); b2: scalar-like.

    For best HBM throughput supply x already in bf16 (do NOT cast here — a
    wrapper-side convert is an extra full pass over x in HBM).  Only the tiny
    w1 is cast to x's dtype so the MXU sees matching inputs.
    """
    B, in_dim = x.shape
    hidden = w1.shape[1]
    x_dtype = x.dtype

    # Tiny operands only: cast w1 to match x (bf16 path), keep the rest f32.
    w1 = jnp.asarray(w1).astype(x_dtype)
    b1 = jnp.asarray(b1, jnp.float32).reshape(1, hidden)
    w2_row = jnp.asarray(w2, jnp.float32).reshape(1, hidden)
    b2 = jnp.asarray(b2, jnp.float32).reshape(1, 1)

    # Tile selection.
    #  * bf16 x -> 2048 rows/tile (bigger tiles amortize the ~0.35us/step
    #    pipeline overhead); f32 x -> 1024 rows/tile (safe against v5e's
    #    16 MiB default scoped VMEM with double-buffered x).
    #  * For large batches, cap the tile so there are >=2 grid steps and both
    #    v7x TensorCores get work under dimension_semantics=("parallel",).
    if tile_b is None:
        tile_b = 2048 if jnp.dtype(x_dtype).itemsize <= 2 else 1024
    if B > 512:
        tile_b = min(tile_b, max(512, _round_up(pl.cdiv(B, 2), 8)))
    tile_b = max(8, min(tile_b, _round_up(B, 8)))  # multiple of 8 sublanes

    grid = (pl.cdiv(B, tile_b),)  # partial last block handled by Pallas

    x_bytes = jnp.dtype(x_dtype).itemsize
    cost = pl.CostEstimate(
        flops=2 * B * in_dim * hidden + 2 * B * hidden,
        transcendentals=B,  # one exp per row (sigmoid)
        bytes_accessed=(B * in_dim * x_bytes            # x stream (dominant)
                        + in_dim * hidden * x_bytes     # w1 (once)
                        + (2 * hidden + 1) * 4          # b1, w2_row, b2
                        + B * 4),                       # output
    )

    return pl.pallas_call(
        disc_kernel,
        out_shape=jax.ShapeDtypeStruct((B, 1), jnp.float32),
        grid=grid,
        in_specs=[
            # x: tiled over the batch axis -> double-buffered HBM->VMEM DMA.
            pl.BlockSpec((tile_b, in_dim), lambda i: (i, 0)),
            # Resident operands: constant index_map, single-buffered.
            pl.BlockSpec((in_dim, hidden), lambda i: (0, 0),
                         pipeline_mode=pl.Buffered(1)),
            pl.BlockSpec((1, hidden), lambda i: (0, 0),
                         pipeline_mode=pl.Buffered(1)),
            pl.BlockSpec((1, hidden), lambda i: (0, 0),
                         pipeline_mode=pl.Buffered(1)),
            # Scalar bias lives in SMEM.
            pl.BlockSpec(memory_space=pltpu.MemorySpace.SMEM),
        ],
        out_specs=pl.BlockSpec((tile_b, 1), lambda i: (i, 0)),
        compiler_params=pltpu.CompilerParams(
            dimension_semantics=("parallel",)),
        cost_estimate=cost,
    )(x, w1, b1, w2_row, b2)
    # TODO(synk): optional int8 x + per-row scale path for v5e/v6e (not v7x).


def init_params(key):
    """Deterministic init mimicking torch.nn.Linear's U(-1/sqrt(fan_in), +)."""
    k1, k2, k3, k4 = jax.random.split(key, 4)
    bound1 = 1.0 / math.sqrt(IMG_DIM)
    w1 = jax.random.uniform(k1, (IMG_DIM, HIDDEN), jnp.float32, -bound1, bound1)
    b1 = jax.random.uniform(k2, (1, HIDDEN), jnp.float32, -bound1, bound1)
    bound2 = 1.0 / math.sqrt(HIDDEN)
    w2 = jax.random.uniform(k3, (HIDDEN, 1), jnp.float32, -bound2, bound2)
    b2 = jax.random.uniform(k4, (1, 1), jnp.float32, -bound2, bound2)
    return w1, b1, w2, b2


def _reference(x, w1, b1, w2, b2):
    h = x.astype(jnp.float32) @ w1 + b1
    h = jnp.where(h >= 0, h, 0.1 * h)
    return jax.nn.sigmoid(h @ w2 + b2)


if __name__ == "__main__":
    key = jax.random.PRNGKey(0)
    k_params, k_x1, k_x2, k_x3 = jax.random.split(key, 4)
    w1, b1, w2, b2 = init_params(k_params)

    # Case 1: small f32 batch, single grid step (exact sigmoid -> tight tol).
    B1 = 8
    x1 = jax.random.normal(k_x1, (B1, IMG_DIM), dtype=jnp.float32)
    out1 = jax.block_until_ready(discriminator_forward(x1, w1, b1, w2, b2))
    ref1 = _reference(x1, w1, b1, w2, b2)
    assert out1.shape == (B1, 1)
    assert jnp.allclose(out1, ref1, atol=1e-5, rtol=1e-5)

    # Case 2: B not a multiple of the tile -> partial last block, no padding.
    B2 = 20
    x2 = jax.random.normal(k_x2, (B2, IMG_DIM), dtype=jnp.float32)
    out2 = jax.block_until_ready(
        discriminator_forward(x2, w1, b1, w2, b2, tile_b=8))
    ref2 = _reference(x2, w1, b1, w2, b2)
    assert out2.shape == (B2, 1)
    assert jnp.allclose(out2, ref2, atol=1e-5, rtol=1e-5)

    # Case 3: recommended fast path — x arrives in bf16 from upstream (no
    # wrapper-side convert); looser tolerance from bf16 input quantization.
    B3 = 16
    x3 = jax.random.normal(k_x3, (B3, IMG_DIM), dtype=jnp.float32)
    x3_bf16 = x3.astype(jnp.bfloat16)  # stands in for an upstream bf16 producer
    out3 = jax.block_until_ready(
        discriminator_forward(x3_bf16, w1, b1, w2, b2))
    ref3 = _reference(x3, w1, b1, w2, b2)
    assert out3.shape == (B3, 1)
    assert jnp.allclose(out3, ref3, atol=3e-2, rtol=3e-2)

    print("KERNEL_OK")
</pallas_src>

<mosaic_0001>
module attributes {stable_mosaic.version = 11 : i64} {
  func.func @disc_kernel(%arg0: i32, %arg1: memref<8x784xf32, #tpu.memory_space<vmem>>, %arg2: memref<784x128xf32, #tpu.memory_space<vmem>>, %arg3: memref<1x128xf32, #tpu.memory_space<vmem>>, %arg4: memref<1x128xf32, #tpu.memory_space<vmem>>, %arg5: memref<1x1xf32, #tpu.memory_space<smem>>, %arg6: memref<8x1xf32, #tpu.memory_space<vmem>>) attributes {dimension_semantics = [#tpu.dimension_semantics<parallel>], iteration_bounds = array<i64: 1>, scalar_prefetch = 0 : i64, scratch_operands = 0 : i64, tpu.core_type = #tpu.core_type<tc>, window_params = [{transform_indices = @transform_0, window_bounds = array<i64: 8, 784>}, {pipeline_mode = #tpu.pipeline_mode<synchronous>, transform_indices = @transform_1, window_bounds = array<i64: 784, 128>}, {pipeline_mode = #tpu.pipeline_mode<synchronous>, transform_indices = @transform_2, window_bounds = array<i64: 1, 128>}, {pipeline_mode = #tpu.pipeline_mode<synchronous>, transform_indices = @transform_3, window_bounds = array<i64: 1, 128>}, {transform_indices = @transform_4, window_bounds = array<i64: 1, 1>}, {transform_indices = @transform_5, window_bounds = array<i64: 8, 1>}]} {
    %c0 = arith.constant 0 : index
    %c0_0 = arith.constant 0 : index
    %0 = vector.load %arg1[%c0, %c0_0] : memref<8x784xf32, #tpu.memory_space<vmem>>, vector<8x784xf32>
    %c0_1 = arith.constant 0 : index
    %c0_2 = arith.constant 0 : index
    %1 = vector.load %arg2[%c0_1, %c0_2] : memref<784x128xf32, #tpu.memory_space<vmem>>, vector<784x128xf32>
    %cst = arith.constant dense<0.000000e+00> : vector<8x128xf32>
    %2 = tpu.matmul %0, %1, %cst {dimension_numbers = #tpu.dot_dimension_numbers<[1], [0], [0], [1], [0, 0, 1, 1], [], []>} : vector<8x784xf32>, vector<784x128xf32>, vector<8x128xf32> -> vector<8x128xf32>
    %c0_3 = arith.constant 0 : index
    %c0_4 = arith.constant 0 : index
    %3 = vector.load %arg3[%c0_3, %c0_4] : memref<1x128xf32, #tpu.memory_space<vmem>>, vector<1x128xf32>
    %4 = vector.broadcast %3 : vector<1x128xf32> to vector<8x128xf32>
    %5 = arith.addf %2, %4 : vector<8x128xf32>
    %cst_5 = arith.constant 0.000000e+00 : f32
    %6 = vector.broadcast %cst_5 : f32 to vector<8x128xf32>
    %7 = arith.cmpf oge, %5, %6 : vector<8x128xf32>
    %cst_6 = arith.constant 1.000000e-01 : f32
    %8 = vector.broadcast %cst_6 : f32 to vector<8x128xf32>
    %9 = arith.mulf %8, %5 : vector<8x128xf32>
    %10 = arith.select %7, %5, %9 : vector<8x128xi1>, vector<8x128xf32>
    %c0_7 = arith.constant 0 : index
    %c0_8 = arith.constant 0 : index
    %11 = vector.load %arg4[%c0_7, %c0_8] : memref<1x128xf32, #tpu.memory_space<vmem>>, vector<1x128xf32>
    %12 = vector.broadcast %11 : vector<1x128xf32> to vector<8x128xf32>
    %13 = arith.mulf %10, %12 : vector<8x128xf32>
    %cst_9 = arith.constant dense<0.000000e+00> : vector<8xf32>
    %14 = vector.multi_reduction <add>, %13, %cst_9 [1] : vector<8x128xf32> to vector<8xf32>
    %15 = vector.shape_cast %14 : vector<8xf32> to vector<8x1xf32>
    %c0_10 = arith.constant 0 : index
    %c0_11 = arith.constant 0 : index
    %16 = memref.load %arg5[%c0_10, %c0_11] : memref<1x1xf32, #tpu.memory_space<smem>>
    %17 = vector.broadcast %16 : f32 to vector<8x1xf32>
    %18 = arith.addf %15, %17 : vector<8x1xf32>
    %19 = arith.negf %18 : vector<8x1xf32>
    %20 = math.exp %19 : vector<8x1xf32>
    %cst_12 = arith.constant 1.000000e+00 : f32
    %21 = vector.broadcast %cst_12 : f32 to vector<8x1xf32>
    %22 = arith.addf %21, %20 : vector<8x1xf32>
    %23 = arith.divf %21, %22 : vector<8x1xf32>
    %c0_13 = arith.constant 0 : index
    %c0_14 = arith.constant 0 : index
    %24 = vector.load %arg6[%c0_13, %c0_14] : memref<8x1xf32, #tpu.memory_space<vmem>>, vector<8x1xf32>
    tpu.vector_store %arg6[%c0_13, %c0_14], %23 {strides = array<i32>} : memref<8x1xf32, #tpu.memory_space<vmem>>, vector<8x1xf32>,
    return
  }
  func.func @transform_0(%arg0: i32) -> (i32, i32) {
    %c0_i32 = arith.constant 0 : i32
    %c0_i32_0 = arith.constant 0 : i32
    return %arg0, %c0_i32 : i32, i32
  }
  func.func @transform_1(%arg0: i32) -> (i32, i32) {
    %c0_i32 = arith.constant 0 : i32
    %c0_i32_0 = arith.constant 0 : i32
    %c0_i32_1 = arith.constant 0 : i32
    return %c0_i32, %c0_i32_0 : i32, i32
  }
  func.func @transform_2(%arg0: i32) -> (i32, i32) {
    %c0_i32 = arith.constant 0 : i32
    %c0_i32_0 = arith.constant 0 : i32
    %c0_i32_1 = arith.constant 0 : i32
    return %c0_i32, %c0_i32_0 : i32, i32
  }
  func.func @transform_3(%arg0: i32) -> (i32, i32) {
    %c0_i32 = arith.constant 0 : i32
    %c0_i32_0 = arith.constant 0 : i32
    %c0_i32_1 = arith.constant 0 : i32
    return %c0_i32, %c0_i32_0 : i32, i32
  }
  func.func @transform_4(%arg0: i32) -> (i32, i32) {
    %c0_i32 = arith.constant 0 : i32
    %c0_i32_0 = arith.constant 0 : i32
    %c0_i32_1 = arith.constant 0 : i32
    return %c0_i32, %c0_i32_0 : i32, i32
  }
  func.func @transform_5(%arg0: i32) -> (i32, i32) {
    %c0_i32 = arith.constant 0 : i32
    %c0_i32_0 = arith.constant 0 : i32
    return %arg0, %c0_i32 : i32, i32
  }
}

</mosaic_0001>

<llo_original>
// kernel: tpu_custom_call.1
$region0: #{tpu_custom_call.1}
  #allocation0 [shape = 'u32[]', space=smem, size = 0x4, offset = 0x4, fixed_abs, tag = 'smem constant byte address 0x4 - core index']
  #allocation1 [shape = 'u32[72,128]{1,0:T(1,128)}', space=vmem, size = 0x9000, scoped, tag = 'internal scratch']
  #allocation2 [shape = 'f32[1,1]{1,0:T(1,128)S(6)}', space=smem, size = 0x200, scoped, tag = 'scoped memory for tpu_custom_call.1']
  %s0 = inlined_call_operand.hbm [shape: f32[8,784], index: 0, kind: input, shape index: {}]
  %s1 = inlined_call_operand.hbm [shape: f32[784,128], index: 1, kind: input, shape index: {}]
  %s2 = inlined_call_operand.vmem [shape: f32[1,128], index: 2, kind: input, shape index: {}]
  %s3 = inlined_call_operand.vmem [shape: f32[1,128], index: 3, kind: input, shape index: {}]
  %s4 = inlined_call_operand.<no memory space> [shape: f32[1,1], index: 4, kind: input, shape index: {}]
  %s5 = inlined_call_operand.vmem [shape: f32[8,1], index: 5, kind: output, shape index: {}]
  %s6 = sld [smem:[#allocation0]]
  $region38: #{tpu_custom_call.1} parent=0
    _
  %s8 = ssub.s32 1, %s6
  %s9 = scalar_select 0, %s8, %s6
  %10 = sst [smem:[#allocation2]] %s4
  $region1: #{tpu_custom_call.1} parent=0
    #allocation3 [shape = 'u8[28672]{0}', space=vmem, size = 0x7000, scoped, tag = 'input window, operand 0, single buffered']
    #allocation4 [shape = 's32[1]{0}', space=sflag, size = 0x4, scoped, tag = 'scoped memory for tpu_custom_call.1']
    #allocation5 [shape = 'u8[401408]{0}', space=vmem, size = 0x62000, scoped, tag = 'input window, operand 1, single buffered']
    #allocation6 [shape = 's32[1]{0}', space=sflag, size = 0x4, scoped, tag = 'scoped memory for tpu_custom_call.1']
    %11 = vsyncpa [#allocation4], 0
    %12 = vsyncpa [#allocation6], 0
    // Predicated region
    $region2: #{tpu_custom_call.1} parent=1 // pred_check
      _
    $region3: #{tpu_custom_call.1} parent=1 // pred_check_branch
      %14 = sbr.rel (0) target = $region5
    $region4: #{tpu_custom_call.1} parent=1 // pred_region
      %16 = vsyncadd [#allocation4], 0
      %s18 = sshll.u32 %s0, 4
      %s19 = int_to_ptr.hbm [resolvable:$true] %s18
      %s20 = sshll.u32 [#allocation3], 4
      %s21 = int_to_ptr.vmem [resolvable:$true] %s20
      %23 = dma.hbm_to_vmem [thread:$0]  %s19, 896, %s21, [#allocation4]
    $region5: #{tpu_custom_call.1} parent=1 // pred_fallthru
      _
    // Predicated region
    $region6: #{tpu_custom_call.1} parent=1 // pred_check
      _
    $region7: #{tpu_custom_call.1} parent=1 // pred_check_branch
      %25 = sbr.rel (0) target = $region9
    $region8: #{tpu_custom_call.1} parent=1 // pred_region
      %27 = vsyncadd [#allocation6], 0
      %s28 = sshll.u32 %s1, 4
      %s29 = int_to_ptr.hbm [resolvable:$true] %s28
      %s30 = sshll.u32 [#allocation5], 4
      %s31 = int_to_ptr.vmem [resolvable:$true] %s30
      %36 = dma.hbm_to_vmem [thread:$0]  %s29, 12544, %s31, [#allocation6], 128, 128, 8
    $region9: #{tpu_custom_call.1} parent=1 // pred_fallthru
      _
    // Predicated region
    $region10: #{tpu_custom_call.1} parent=1 // pred_check
      _
    $region11: #{tpu_custom_call.1} parent=1 // pred_check_branch
      %38 = sbr.rel (0) target = $region13
    $region12: #{tpu_custom_call.1} parent=1 // pred_region
      _
    $region13: #{tpu_custom_call.1} parent=1 // pred_fallthru
      _
    // Predicated region
    $region14: #{tpu_custom_call.1} parent=1 // pred_check
      _
    $region15: #{tpu_custom_call.1} parent=1 // pred_check_branch
      %40 = sbr.rel (0) target = $region17
    $region16: #{tpu_custom_call.1} parent=1 // pred_region
      _
    $region17: #{tpu_custom_call.1} parent=1 // pred_fallthru
      _
    // Predicated region
    $region18: #{tpu_custom_call.1} parent=1 // pred_check
      _
    $region19: #{tpu_custom_call.1} parent=1 // pred_check_branch
      %42 = sbr.rel (0) target = $region21
    $region20: #{tpu_custom_call.1} parent=1 // pred_region
      _
    $region21: #{tpu_custom_call.1} parent=1 // pred_fallthru
      _
    // Predicated region
    $region22: #{tpu_custom_call.1} parent=1 // pred_check
      _
    $region23: #{tpu_custom_call.1} parent=1 // pred_check_branch
      %44 = sbr.rel (0) target = $region25
    $region24: #{tpu_custom_call.1} parent=1 // pred_region
      %46 = dma.done [#allocation4], 896
    $region25: #{tpu_custom_call.1} parent=1 // pred_fallthru
      _
    // Predicated region
    $region26: #{tpu_custom_call.1} parent=1 // pred_check
      _
    $region27: #{tpu_custom_call.1} parent=1 // pred_check_branch
      %48 = sbr.rel (0) target = $region29
    $region28: #{tpu_custom_call.1} parent=1 // pred_region
      %50 = dma.done [#allocation6], 12544
    $region29: #{tpu_custom_call.1} parent=1 // pred_fallthru
      _
    %v51 = vld [vmem:[#allocation3] sm:$0xff]
    %v52 = vld [vmem:[#allocation3 + $0x8] sm:$0xff]
    %v53 = vld [vmem:[#allocation3 + $0x10] sm:$0xff]
    %v54 = vld [vmem:[#allocation3 + $0x18] sm:$0xff]
    %v55 = vld [vmem:[#allocation3 + $0x20] sm:$0xff]
    %v56 = vld [vmem:[#allocation3 + $0x28] sm:$0xff]
    %v57 = vld [vmem:[#allocation3 + $0x30] sm:$0xff]
    %v58 = vld [vmem:[#allocation5] sm:$0xff]
    %v59 = vld [vmem:[#allocation5 + $0x8] sm:$0xff]
    %v60 = vld [vmem:[#allocation5 + $0x10] sm:$0xff]
    %v61 = vld [vmem:[#allocation5 + $0x18] sm:$0xff]
    %v62 = vld [vmem:[#allocation5 + $0x20] sm:$0xff]
    %v63 = vld [vmem:[#allocation5 + $0x28] sm:$0xff]
    %v64 = vld [vmem:[#allocation5 + $0x30] sm:$0xff]
    %v65 = vld [vmem:[#allocation5 + $0x38] sm:$0xff]
    %v66 = vld [vmem:[#allocation5 + $0x40] sm:$0xff]
    %v67 = vld [vmem:[#allocation5 + $0x48] sm:$0xff]
    %v68 = vld [vmem:[#allocation5 + $0x50] sm:$0xff]
    %v69 = vld [vmem:[#allocation5 + $0x58] sm:$0xff]
    %v70 = vld [vmem:[#allocation5 + $0x60] sm:$0xff]
    %v71 = vld [vmem:[#allocation5 + $0x68] sm:$0xff]
    %v72 = vld [vmem:[#allocation5 + $0x70] sm:$0xff]
    %v73 = vld [vmem:[#allocation5 + $0x78] sm:$0xff]
    %v74 = vld [vmem:[#allocation5 + $0x80] sm:$0xff]
    %v75 = vld [vmem:[#allocation5 + $0x88] sm:$0xff]
    %v76 = vld [vmem:[#allocation5 + $0x90] sm:$0xff]
    %v77 = vld [vmem:[#allocation5 + $0x98] sm:$0xff]
    %v78 = vld [vmem:[#allocation5 + $0xa0] sm:$0xff]
    %v79 = vld [vmem:[#allocation5 + $0xa8] sm:$0xff]
    %v80 = vld [vmem:[#allocation5 + $0xb0] sm:$0xff]
    %v81 = vld [vmem:[#allocation5 + $0xb8] sm:$0xff]
    %v82 = vld [vmem:[#allocation5 + $0xc0] sm:$0xff]
    %v83 = vld [vmem:[#allocation5 + $0xc8] sm:$0xff]
    %v84 = vld [vmem:[#allocation5 + $0xd0] sm:$0xff]
    %v85 = vld [vmem:[#allocation5 + $0xd8] sm:$0xff]
    %v86 = vld [vmem:[#allocation5 + $0xe0] sm:$0xff]
    %v87 = vld [vmem:[#allocation5 + $0xe8] sm:$0xff]
    %v88 = vld [vmem:[#allocation5 + $0xf0] sm:$0xff]
    %v89 = vld [vmem:[#allocation5 + $0xf8] sm:$0xff]
    %v90 = vld [vmem:[#allocation5 + $0x100] sm:$0xff]
    %v91 = vld [vmem:[#allocation5 + $0x108] sm:$0xff]
    %v92 = vld [vmem:[#allocation5 + $0x110] sm:$0xff]
    %v93 = vld [vmem:[#allocation5 + $0x118] sm:$0xff]
    %v94 = vld [vmem:[#allocation5 + $0x120] sm:$0xff]
    %v95 = vld [vmem:[#allocation5 + $0x128] sm:$0xff]
    %v96 = vld [vmem:[#allocation5 + $0x130] sm:$0xff]
    %v97 = vld [vmem:[#allocation5 + $0x138] sm:$0xff]
    %v98 = vld [vmem:[#allocation5 + $0x140] sm:$0xff]
    %v99 = vld [vmem:[#allocation5 + $0x148] sm:$0xff]
    %v100 = vld [vmem:[#allocation5 + $0x150] sm:$0xff]
    %v101 = vld [vmem:[#allocation5 + $0x158] sm:$0xff]
    %v102 = vld [vmem:[#allocation5 + $0x160] sm:$0xff]
    %v103 = vld [vmem:[#allocation5 + $0x168] sm:$0xff]
    %v104 = vld [vmem:[#allocation5 + $0x170] sm:$0xff]
    %v105 = vld [vmem:[#allocation5 + $0x178] sm:$0xff]
    %v106 = vld [vmem:[#allocation5 + $0x180] sm:$0xff]
    %v107 = vld [vmem:[#allocation5 + $0x188] sm:$0xff]
    %v108 = vld [vmem:[#allocation5 + $0x190] sm:$0xff]
    %v109 = vld [vmem:[#allocation5 + $0x198] sm:$0xff]
    %v110 = vld [vmem:[#allocation5 + $0x1a0] sm:$0xff]
    %v111 = vld [vmem:[#allocation5 + $0x1a8] sm:$0xff]
    %v112 = vld [vmem:[#allocation5 + $0x1b0] sm:$0xff]
    %v113 = vld [vmem:[#allocation5 + $0x1b8] sm:$0xff]
    %v114 = vld [vmem:[#allocation5 + $0x1c0] sm:$0xff]
    %v115 = vld [vmem:[#allocation5 + $0x1c8] sm:$0xff]
    %v116 = vld [vmem:[#allocation5 + $0x1d0] sm:$0xff]
    %v117 = vld [vmem:[#allocation5 + $0x1d8] sm:$0xff]
    %v118 = vld [vmem:[#allocation5 + $0x1e0] sm:$0xff]
    %v119 = vld [vmem:[#allocation5 + $0x1e8] sm:$0xff]
    %v120 = vld [vmem:[#allocation5 + $0x1f0] sm:$0xff]
    %v121 = vld [vmem:[#allocation5 + $0x1f8] sm:$0xff]
    %v122 = vld [vmem:[#allocation5 + $0x200] sm:$0xff]
    %v123 = vld [vmem:[#allocation5 + $0x208] sm:$0xff]
    %v124 = vld [vmem:[#allocation5 + $0x210] sm:$0xff]
    %v125 = vld [vmem:[#allocation5 + $0x218] sm:$0xff]
    %v126 = vld [vmem:[#allocation5 + $0x220] sm:$0xff]
    %v127 = vld [vmem:[#allocation5 + $0x228] sm:$0xff]
    %v128 = vld [vmem:[#allocation5 + $0x230] sm:$0xff]
    %v129 = vld [vmem:[#allocation5 + $0x238] sm:$0xff]
    %v130 = vld [vmem:[#allocation5 + $0x240] sm:$0xff]
    %v131 = vld [vmem:[#allocation5 + $0x248] sm:$0xff]
    %v132 = vld [vmem:[#allocation5 + $0x250] sm:$0xff]
    %v133 = vld [vmem:[#allocation5 + $0x258] sm:$0xff]
    %v134 = vld [vmem:[#allocation5 + $0x260] sm:$0xff]
    %v135 = vld [vmem:[#allocation5 + $0x268] sm:$0xff]
    %v136 = vld [vmem:[#allocation5 + $0x270] sm:$0xff]
    %v137 = vld [vmem:[#allocation5 + $0x278] sm:$0xff]
    %v138 = vld [vmem:[#allocation5 + $0x280] sm:$0xff]
    %v139 = vld [vmem:[#allocation5 + $0x288] sm:$0xff]
    %v140 = vld [vmem:[#allocation5 + $0x290] sm:$0xff]
    %v141 = vld [vmem:[#allocation5 + $0x298] sm:$0xff]
    %v142 = vld [vmem:[#allocation5 + $0x2a0] sm:$0xff]
    %v143 = vld [vmem:[#allocation5 + $0x2a8] sm:$0xff]
    %v144 = vld [vmem:[#allocation5 + $0x2b0] sm:$0xff]
    %v145 = vld [vmem:[#allocation5 + $0x2b8] sm:$0xff]
    %v146 = vld [vmem:[#allocation5 + $0x2c0] sm:$0xff]
    %v147 = vld [vmem:[#allocation5 + $0x2c8] sm:$0xff]
    %v148 = vld [vmem:[#allocation5 + $0x2d0] sm:$0xff]
    %v149 = vld [vmem:[#allocation5 + $0x2d8] sm:$0xff]
    %v150 = vld [vmem:[#allocation5 + $0x2e0] sm:$0xff]
    %v151 = vld [vmem:[#allocation5 + $0x2e8] sm:$0xff]
    %v152 = vld [vmem:[#allocation5 + $0x2f0] sm:$0xff]
    %v153 = vld [vmem:[#allocation5 + $0x2f8] sm:$0xff]
    %v154 = vld [vmem:[#allocation5 + $0x300] sm:$0xff]
    %v155 = vld [vmem:[#allocation5 + $0x308] sm:$0xff]
    %v156 = vld [vmem:[%s2] sm:$0x1]
    %v158 = vperm.slane %v156, 0
    %vm160 = vcmask 130048
    %v162 = vsel %vm160, %v57, 0
    %164 = vmatpush.msra.mxu0 %v73
    %165 = vmatpush.msra.mxu0 %v72
    %166 = vmatpush.msra.mxu0 %v71
    %167 = vmatpush.msra.mxu0 %v70
    %168 = vmatpush.msra.mxu0 %v69
    %169 = vmatpush.msra.mxu0 %v68
    %170 = vmatpush.msra.mxu0 %v67
    %171 = vmatpush.msra.mxu0 %v66
    %172 = vmatpush.msra.mxu0 %v65
    %173 = vmatpush.msra.mxu0 %v64
    %174 = vmatpush.msra.mxu0 %v63
    %175 = vmatpush.msra.mxu0 %v62
    %176 = vmatpush.msra.mxu0 %v61
    %177 = vmatpush.msra.mxu0 %v60
    %178 = vmatpush.msra.mxu0 %v59
    %179 = vmatpush.msra.mxu0 %v58
    %180 = vmatmul.f32.gmra.mxu0 %v51
    %v181 = vpop.f32.mrf.mxu0
    %v182 = vadd.f32 %v158, %v181
    %183 = vdwg.mxu0
    %184 = vmatpush.msra.mxu0 %v89
    %185 = vmatpush.msra.mxu0 %v88
    %186 = vmatpush.msra.mxu0 %v87
    %187 = vmatpush.msra.mxu0 %v86
    %188 = vmatpush.msra.mxu0 %v85
    %189 = vmatpush.msra.mxu0 %v84
    %190 = vmatpush.msra.mxu0 %v83
    %191 = vmatpush.msra.mxu0 %v82
    %192 = vmatpush.msra.mxu0 %v81
    %193 = vmatpush.msra.mxu0 %v80
    %194 = vmatpush.msra.mxu0 %v79
    %195 = vmatpush.msra.mxu0 %v78
    %196 = vmatpush.msra.mxu0 %v77
    %197 = vmatpush.msra.mxu0 %v76
    %198 = vmatpush.msra.mxu0 %v75
    %199 = vmatpush.msra.mxu0 %v74
    %200 = vmatmul.f32.gmra.mxu0 %v52
    %v201 = vpop.f32.mrf.mxu0
    %v202 = vadd.f32 %v182, %v201
    %203 = vdwg.mxu0
    %204 = vmatpush.msra.mxu0 %v105
    %205 = vmatpush.msra.mxu0 %v104
    %206 = vmatpush.msra.mxu0 %v103
    %207 = vmatpush.msra.mxu0 %v102
    %208 = vmatpush.msra.mxu0 %v101
    %209 = vmatpush.msra.mxu0 %v100
    %210 = vmatpush.msra.mxu0 %v99
    %211 = vmatpush.msra.mxu0 %v98
    %212 = vmatpush.msra.mxu0 %v97
    %213 = vmatpush.msra.mxu0 %v96
    %214 = vmatpush.msra.mxu0 %v95
    %215 = vmatpush.msra.mxu0 %v94
    %216 = vmatpush.msra.mxu0 %v93
    %217 = vmatpush.msra.mxu0 %v92
    %218 = vmatpush.msra.mxu0 %v91
    %219 = vmatpush.msra.mxu0 %v90
    %220 = vmatmul.f32.gmra.mxu0 %v53
    %v221 = vpop.f32.mrf.mxu0
    %v222 = vadd.f32 %v202, %v221
    %223 = vdwg.mxu0
    %224 = vmatpush.msra.mxu0 %v121
    %225 = vmatpush.msra.mxu0 %v120
    %226 = vmatpush.msra.mxu0 %v119
    %227 = vmatpush.msra.mxu0 %v118
    %228 = vmatpush.msra.mxu0 %v117
    %229 = vmatpush.msra.mxu0 %v116
    %230 = vmatpush.msra.mxu0 %v115
    %231 = vmatpush.msra.mxu0 %v114
    %232 = vmatpush.msra.mxu0 %v113
    %233 = vmatpush.msra.mxu0 %v112
    %234 = vmatpush.msra.mxu0 %v111
    %235 = vmatpush.msra.mxu0 %v110
    %236 = vmatpush.msra.mxu0 %v109
    %237 = vmatpush.msra.mxu0 %v108
    %238 = vmatpush.msra.mxu0 %v107
    %239 = vmatpush.msra.mxu0 %v106
    %240 = vmatmul.f32.gmra.mxu0 %v54
    %v241 = vpop.f32.mrf.mxu0
    %v242 = vadd.f32 %v222, %v241
    %243 = vdwg.mxu0
    %244 = vmatpush.msra.mxu0 %v137
    %245 = vmatpush.msra.mxu0 %v136
    %246 = vmatpush.msra.mxu0 %v135
    %247 = vmatpush.msra.mxu0 %v134
    %248 = vmatpush.msra.mxu0 %v133
    %249 = vmatpush.msra.mxu0 %v132
    %250 = vmatpush.msra.mxu0 %v131
    %251 = vmatpush.msra.mxu0 %v130
    %252 = vmatpush.msra.mxu0 %v129
    %253 = vmatpush.msra.mxu0 %v128
    %254 = vmatpush.msra.mxu0 %v127
    %255 = vmatpush.msra.mxu0 %v126
    %256 = vmatpush.msra.mxu0 %v125
    %257 = vmatpush.msra.mxu0 %v124
    %258 = vmatpush.msra.mxu0 %v123
    %259 = vmatpush.msra.mxu0 %v122
    %260 = vmatmul.f32.gmra.mxu0 %v55
    %v261 = vpop.f32.mrf.mxu0
    %v262 = vadd.f32 %v242, %v261
    %263 = vdwg.mxu0
    %264 = vmatpush.msra.mxu0 %v153
    %265 = vmatpush.msra.mxu0 %v152
    %266 = vmatpush.msra.mxu0 %v151
    %267 = vmatpush.msra.mxu0 %v150
    %268 = vmatpush.msra.mxu0 %v149
    %269 = vmatpush.msra.mxu0 %v148
    %270 = vmatpush.msra.mxu0 %v147
    %271 = vmatpush.msra.mxu0 %v146
    %272 = vmatpush.msra.mxu0 %v145
    %273 = vmatpush.msra.mxu0 %v144
    %274 = vmatpush.msra.mxu0 %v143
    %275 = vmatpush.msra.mxu0 %v142
    %276 = vmatpush.msra.mxu0 %v141
    %277 = vmatpush.msra.mxu0 %v140
    %278 = vmatpush.msra.mxu0 %v139
    %279 = vmatpush.msra.mxu0 %v138
    %280 = vmatmul.f32.gmra.mxu0 %v56
    %v281 = vpop.f32.mrf.mxu0
    %v282 = vadd.f32 %v262, %v281
    %283 = vdwg.mxu0
    %284 = vmatpush.msra.mxu0 0.0
    %285 = vmatpush.msra.mxu0 0.0
    %286 = vmatpush.msra.mxu0 0.0
    %287 = vmatpush.msra.mxu0 0.0
    %288 = vmatpush.msra.mxu0 0.0
    %289 = vmatpush.msra.mxu0 0.0
    %290 = vmatpush.msra.mxu0 0.0
    %291 = vmatpush.msra.mxu0 0.0
    %292 = vmatpush.msra.mxu0 0.0
    %293 = vmatpush.msra.mxu0 0.0
    %294 = vmatpush.msra.mxu0 0.0
    %295 = vmatpush.msra.mxu0 0.0
    %296 = vmatpush.msra.mxu0 0.0
    %297 = vmatpush.msra.mxu0 0.0
    %298 = vmatpush.msra.mxu0 %v155
    %299 = vmatpush.msra.mxu0 %v154
    %300 = vmatmul.f32.gmra.mxu0 %v162
    %v301 = vpop.f32.mrf.mxu0
    %v302 = vadd.f32 %v282, %v301
    %303 = vdwg.mxu0
    %vm304 = vcmp.ge.f32.partialorder %v302, 0.0
    %v305 = vmul.f32 %v302, 0.1
    %v306 = vsel %vm304, %v302, %v305
    %v307 = vld [vmem:[%s3] sm:$0x1]
    %v309 = vperm.slane %v307, 0
    %v311 = vmul.f32 %v306, %v309
    %312 = vadd.xlane.f32.xlu0 %v311
    %v313 = vpop.xlane.xlu0 %312
    %s314 = sld [smem:[#allocation2]]
    %v315 = vstv %s314
    %v316 = vadd.f32 %v313, %v315
    %v317 = vxor.u32 %v316, 2147483648
    %v318 = vmul.f32 %v317, 1.442695
    %v319 = vpow.pop %v318
    %v320 = vadd.f32 %v319, 1.0
    %v321 = vrcp.pop %v320
    %v322 = vmul.f32 %v320, %v321
    %v323 = vsub.f32 1.0, %v322
    %v324 = vmul.f32 %v321, %v323
    %v325 = vadd.f32 %v321, %v324
    %vm326 = vweird.f32 %v320
    %vm327 = vweird.f32 %v321
    %vm328 = vmor %vm326, %vm327
    %v329 = vsel %vm328, %v321, %v325
    %v330 = vand.u32 2147483647, %v320
    %vm331 = vcmp.eq.f32.partialorder %v330, 8.507059e+37
    %v332 = vand.u32 %v320, 2147483648
    %v333 = vor.u32 1.1754944e-38, %v332
    %v334 = vsel %vm331, %v333, %v329
    %v335 = vmul.f32 1.0, %v334
    %vm336 = vcmask 7168
    %337 = vst.msk [vmem:[%s5] sm:$0xff] %vm336, %v335
    // Predicated region
    $region30: #{tpu_custom_call.1} parent=1 // pred_check
      _
    $region31: #{tpu_custom_call.1} parent=1 // pred_check_branch
      %339 = sbr.rel (0) target = $region33
    $region32: #{tpu_custom_call.1} parent=1 // pred_region
      _
    $region33: #{tpu_custom_call.1} parent=1 // pred_fallthru
      _
    // Predicated region
    $region34: #{tpu_custom_call.1} parent=1 // pred_check
      _
    $region35: #{tpu_custom_call.1} parent=1 // pred_check_branch
      %341 = sbr.rel (0) target = $region37
    $region36: #{tpu_custom_call.1} parent=1 // pred_region
      _
    $region37: #{tpu_custom_call.1} parent=1 // pred_fallthru
      _
    %342 = vsyncpa [#allocation4], 1
    %343 = vsyncpa [#allocation6], 1

</llo_original>
